<compile_context>
chip_gen: v7x
topology: tpu7x:2x2x1
jax: 0.10.0
libtpu: 0.0.40
codegen_flags: <defaults>
</compile_context>

<pallas_src>
import jax
import jax.numpy as jnp
from jax import lax
from jax.experimental import pallas as pl
from jax.experimental.pallas import tpu as pltpu


def _round_up(x: int, m: int) -> int:
    return ((x + m - 1) // m) * m


def _ffn_kernel(x_ref, w_ref, b_ref, o_ref):
    # x_ref: (tm, d_model); w_ref: (tn, d_model)  (natural nn.Linear layout)
    # b_ref: (1, tn);       o_ref: (tm, tn)
    acc = lax.dot_general(
        x_ref[...], w_ref[...],
        dimension_numbers=(((1,), (1,)), ((), ())),   # contract K of both => x @ W^T
        preferred_element_type=jnp.float32,
    )
    acc = acc + b_ref[...].astype(jnp.float32)        # bias broadcast over rows (f32)
    o_ref[...] = jnp.maximum(acc, 0.0).astype(o_ref.dtype)


def feed_forward(x, weight, bias, *, tm=512, tn=512, use_bf16_matmul=False):
    """y = ReLU(x @ weight.T + bias).

    x: (..., d_model); weight: (hidden, d_model); bias: (hidden,).
    """
    *lead, d_model = x.shape
    hidden = weight.shape[0]
    out_dtype = x.dtype

    M = 1
    for d in lead:
        M *= d
    M = max(M, 1)

    x2d = x.reshape(M, d_model)
    if use_bf16_matmul:
        x2d = x2d.astype(jnp.bfloat16)
        weight = weight.astype(jnp.bfloat16)
    b2d = bias.reshape(1, hidden)

    # Tile sizes, clamped to the problem size while staying TPU-layout legal:
    #  - if the tile is smaller than the dim it is a multiple of 8 (rows) /
    #    128 (lanes); otherwise it equals the full dim.
    tm = min(_round_up(tm, 8), M)
    tn = min(_round_up(tn, 128), hidden)

    # Grid: hidden tiles outer, row tiles inner  =>  W read from HBM once.
    grid = (pl.cdiv(hidden, tn), pl.cdiv(M, tm))

    cost = pl.CostEstimate(
        flops=2 * M * d_model * hidden,
        transcendentals=0,
        bytes_accessed=(x2d.size * x2d.dtype.itemsize
                        + weight.size * weight.dtype.itemsize
                        + b2d.size * b2d.dtype.itemsize
                        + M * hidden * jnp.dtype(out_dtype).itemsize),
    )

    out = pl.pallas_call(
        _ffn_kernel,
        out_shape=jax.ShapeDtypeStruct((M, hidden), out_dtype),
        grid_spec=pltpu.PrefetchScalarGridSpec(
            num_scalar_prefetch=0,
            grid=grid,
            in_specs=[
                pl.BlockSpec((tm, d_model), lambda n, m: (m, 0)),  # x row tile
                pl.BlockSpec((tn, d_model), lambda n, m: (n, 0)),  # W N-tile (resident over m)
                pl.BlockSpec((1, tn),       lambda n, m: (0, n)),  # bias N-tile
            ],
            out_specs=pl.BlockSpec((tm, tn), lambda n, m: (m, n)),
        ),
        compiler_params=pltpu.CompilerParams(
            dimension_semantics=("parallel", "parallel"),
            vmem_limit_bytes=64 * 1024 * 1024,
        ),
        cost_estimate=cost,
    )(x2d, weight, b2d)

    return out.reshape(*lead, hidden)


if __name__ == "__main__":
    # Small shapes consistent with the module: (batch=2, seq=8, d_model=32) -> hidden=64
    B, S, d_model, hidden = 2, 8, 32, 64

    key = jax.random.PRNGKey(0)
    kx, kw, kb = jax.random.split(key, 3)

    x = jax.random.normal(kx, (B, S, d_model), dtype=jnp.float32)
    # Deterministic synthetic parameters (same shapes as nn.Linear(d_model, hidden)).
    weight = jax.random.normal(kw, (hidden, d_model), dtype=jnp.float32) * 0.05
    bias = jax.random.normal(kb, (hidden,), dtype=jnp.float32) * 0.05

    # Reference (same math as the PyTorch forward).
    y_ref = jnp.maximum(x @ weight.T + bias, 0.0)

    # f32 matmul path (exact semantics of the module).
    y = feed_forward(x, weight, bias)
    jax.block_until_ready(y)
    assert y.shape == (B, S, hidden)
    assert jnp.allclose(y, y_ref, atol=1e-5, rtol=1e-5)

    # bf16-MXU path (f32 accumulation + f32 epilogue) — looser tolerance.
    y_bf16 = feed_forward(x, weight, bias, use_bf16_matmul=True)
    jax.block_until_ready(y_bf16)
    assert jnp.allclose(y_bf16, y_ref, atol=5e-2, rtol=5e-2)

    print("KERNEL_OK")
</pallas_src>

<mosaic_0001>
module attributes {stable_mosaic.version = 11 : i64} {
  func.func @_ffn_kernel(%arg0: i32, %arg1: i32, %arg2: memref<16x32xf32, #tpu.memory_space<vmem>>, %arg3: memref<64x32xf32, #tpu.memory_space<vmem>>, %arg4: memref<1x64xf32, #tpu.memory_space<vmem>>, %arg5: memref<16x64xf32, #tpu.memory_space<vmem>>) attributes {dimension_semantics = [#tpu.dimension_semantics<parallel>, #tpu.dimension_semantics<parallel>], iteration_bounds = array<i64: 1, 1>, scalar_prefetch = 0 : i64, scratch_operands = 0 : i64, tpu.core_type = #tpu.core_type<tc>, window_params = [{transform_indices = @transform_0, window_bounds = array<i64: 16, 32>}, {transform_indices = @transform_1, window_bounds = array<i64: 64, 32>}, {transform_indices = @transform_2, window_bounds = array<i64: 1, 64>}, {transform_indices = @transform_3, window_bounds = array<i64: 16, 64>}]} {
    %c0 = arith.constant 0 : index
    %c0_0 = arith.constant 0 : index
    %0 = vector.load %arg2[%c0, %c0_0] : memref<16x32xf32, #tpu.memory_space<vmem>>, vector<16x32xf32>
    %c0_1 = arith.constant 0 : index
    %c0_2 = arith.constant 0 : index
    %1 = vector.load %arg3[%c0_1, %c0_2] : memref<64x32xf32, #tpu.memory_space<vmem>>, vector<64x32xf32>
    %cst = arith.constant dense<0.000000e+00> : vector<16x64xf32>
    %2 = tpu.matmul %0, %1, %cst {dimension_numbers = #tpu.dot_dimension_numbers<[1], [1], [0], [0], [0, 0, 1, 0], [], []>} : vector<16x32xf32>, vector<64x32xf32>, vector<16x64xf32> -> vector<16x64xf32>
    %c0_3 = arith.constant 0 : index
    %c0_4 = arith.constant 0 : index
    %3 = vector.load %arg4[%c0_3, %c0_4] : memref<1x64xf32, #tpu.memory_space<vmem>>, vector<1x64xf32>
    %4 = vector.broadcast %3 : vector<1x64xf32> to vector<16x64xf32>
    %5 = arith.addf %2, %4 : vector<16x64xf32>
    %cst_5 = arith.constant 0.000000e+00 : f32
    %6 = vector.broadcast %cst_5 : f32 to vector<16x64xf32>
    %7 = arith.maximumf %5, %6 : vector<16x64xf32>
    %c0_6 = arith.constant 0 : index
    %c0_7 = arith.constant 0 : index
    %8 = vector.load %arg5[%c0_6, %c0_7] : memref<16x64xf32, #tpu.memory_space<vmem>>, vector<16x64xf32>
    tpu.vector_store %arg5[%c0_6, %c0_7], %7 {strides = array<i32>} : memref<16x64xf32, #tpu.memory_space<vmem>>, vector<16x64xf32>,
    return
  }
  func.func @transform_0(%arg0: i32, %arg1: i32) -> (i32, i32) {
    %c0_i32 = arith.constant 0 : i32
    %c0_i32_0 = arith.constant 0 : i32
    return %arg1, %c0_i32 : i32, i32
  }
  func.func @transform_1(%arg0: i32, %arg1: i32) -> (i32, i32) {
    %c0_i32 = arith.constant 0 : i32
    %c0_i32_0 = arith.constant 0 : i32
    return %arg0, %c0_i32 : i32, i32
  }
  func.func @transform_2(%arg0: i32, %arg1: i32) -> (i32, i32) {
    %c0_i32 = arith.constant 0 : i32
    %c0_i32_0 = arith.constant 0 : i32
    return %c0_i32, %arg0 : i32, i32
  }
  func.func @transform_3(%arg0: i32, %arg1: i32) -> (i32, i32) {
    %c0_i32 = arith.constant 0 : i32
    return %arg1, %arg0 : i32, i32
  }
}

</mosaic_0001>

<llo_original>
// kernel: tpu_custom_call.1
$region0: #{tpu_custom_call.1}
  #allocation0 [shape = 'u32[]', space=smem, size = 0x4, offset = 0x4, fixed_abs, tag = 'smem constant byte address 0x4 - core index']
  #allocation1 [shape = 'u32[144,128]{1,0:T(1,128)}', space=vmem, size = 0x12000, scoped, tag = 'internal scratch']
  %s0 = inlined_call_operand.hbm [shape: f32[16,32], index: 0, kind: input, shape index: {}]
  %s1 = inlined_call_operand.hbm [shape: f32[64,32], index: 1, kind: input, shape index: {}]
  %s2 = inlined_call_operand.hbm [shape: f32[1,64], index: 2, kind: input, shape index: {}]
  %s3 = inlined_call_operand.hbm [shape: f32[16,64], index: 3, kind: output, shape index: {}]
  %s4 = sld [smem:[#allocation0]]
  $region34: #{tpu_custom_call.1} parent=0
    _
  %s6 = ssub.s32 1, %s4
  %s7 = scalar_select 0, %s6, %s4
  $region1: #{tpu_custom_call.1} parent=0
    #allocation2 [shape = 'u8[8192]{0}', space=vmem, size = 0x2000, scoped, tag = 'input window, operand 0, single buffered']
    #allocation3 [shape = 's32[1]{0}', space=sflag, size = 0x4, scoped, tag = 'scoped memory for tpu_custom_call.1']
    #allocation4 [shape = 's32[1]{0}', space=sflag, size = 0x4, scoped, tag = 'scoped memory for tpu_custom_call.1']
    #allocation5 [shape = 'u8[32768]{0}', space=vmem, size = 0x8000, scoped, tag = 'input window, operand 1, single buffered']
    #allocation6 [shape = 's32[1]{0}', space=sflag, size = 0x4, scoped, tag = 'scoped memory for tpu_custom_call.1']
    #allocation7 [shape = 'u8[512]{0}', space=vmem, size = 0x400, scoped, tag = 'input window, operand 2, single buffered']
    #allocation8 [shape = 'u8[8192]{0}', space=vmem, size = 0x2000, scoped, tag = 'output window, operand 0, single buffered']
    %8 = vsyncpa [#allocation3], 0
    %9 = vsyncpa [#allocation6], 0
    %10 = vsyncpa [#allocation4], 0
    // Predicated region
    $region2: #{tpu_custom_call.1} parent=1 // pred_check
      _
    $region3: #{tpu_custom_call.1} parent=1 // pred_check_branch
      %12 = sbr.rel (0) target = $region5
    $region4: #{tpu_custom_call.1} parent=1 // pred_region
      %s14 = ssub.s32 256, 256
      %15 = vsyncadd [#allocation3], %s14
      %s16 = sshll.u32 [#allocation2], 4
      %s17 = int_to_ptr.vmem [resolvable:$true] %s16
      %22 = dma.hbm_to_vmem [thread:$0]  %s0, 256, %s17, [#allocation3], 128, 128, 8
    $region5: #{tpu_custom_call.1} parent=1 // pred_fallthru
      _
    // Predicated region
    $region6: #{tpu_custom_call.1} parent=1 // pred_check
      _
    $region7: #{tpu_custom_call.1} parent=1 // pred_check_branch
      %24 = sbr.rel (0) target = $region9
    $region8: #{tpu_custom_call.1} parent=1 // pred_region
      %s26 = ssub.s32 1024, 1024
      %27 = vsyncadd [#allocation6], %s26
      %s28 = sshll.u32 [#allocation5], 4
      %s29 = int_to_ptr.vmem [resolvable:$true] %s28
      %34 = dma.hbm_to_vmem [thread:$0]  %s1, 1024, %s29, [#allocation6], 128, 128, 8
    $region9: #{tpu_custom_call.1} parent=1 // pred_fallthru
      _
    // Predicated region
    $region10: #{tpu_custom_call.1} parent=1 // pred_check
      _
    $region11: #{tpu_custom_call.1} parent=1 // pred_check_branch
      %36 = sbr.rel (0) target = $region13
    $region12: #{tpu_custom_call.1} parent=1 // pred_region
      %s38 = ssub.s32 16, 16
      %39 = vsyncadd [#allocation6], %s38
      %s41 = sshll.u32 [#allocation7], 4
      %s42 = int_to_ptr.vmem [resolvable:$true] %s41
      %44 = dma.hbm_to_vmem [thread:$0]  %s2, 16, %s42, [#allocation6]
    $region13: #{tpu_custom_call.1} parent=1 // pred_fallthru
      _
    // Predicated region
    $region14: #{tpu_custom_call.1} parent=1 // pred_check
      _
    $region15: #{tpu_custom_call.1} parent=1 // pred_check_branch
      %46 = sbr.rel (0) target = $region17
    $region16: #{tpu_custom_call.1} parent=1 // pred_region
      %47 = dma.done [#allocation3], 256
    $region17: #{tpu_custom_call.1} parent=1 // pred_fallthru
      _
    // Predicated region
    $region18: #{tpu_custom_call.1} parent=1 // pred_check
      _
    $region19: #{tpu_custom_call.1} parent=1 // pred_check_branch
      %49 = sbr.rel (0) target = $region21
    $region20: #{tpu_custom_call.1} parent=1 // pred_region
      %50 = dma.done [#allocation6], 1024
    $region21: #{tpu_custom_call.1} parent=1 // pred_fallthru
      _
    // Predicated region
    $region22: #{tpu_custom_call.1} parent=1 // pred_check
      _
    $region23: #{tpu_custom_call.1} parent=1 // pred_check_branch
      %52 = sbr.rel (0) target = $region25
    $region24: #{tpu_custom_call.1} parent=1 // pred_region
      %53 = dma.done [#allocation6], 16
    $region25: #{tpu_custom_call.1} parent=1 // pred_fallthru
      _
    %v54 = vld [vmem:[#allocation2] sm:$0xff]
    %v55 = vld [vmem:[#allocation2 + $0x8] sm:$0xff]
    %v56 = vld [vmem:[#allocation5] sm:$0xff]
    %v57 = vld [vmem:[#allocation5 + $0x8] sm:$0xff]
    %v58 = vld [vmem:[#allocation5 + $0x10] sm:$0xff]
    %v59 = vld [vmem:[#allocation5 + $0x18] sm:$0xff]
    %v60 = vld [vmem:[#allocation5 + $0x20] sm:$0xff]
    %v61 = vld [vmem:[#allocation5 + $0x28] sm:$0xff]
    %v62 = vld [vmem:[#allocation5 + $0x30] sm:$0xff]
    %v63 = vld [vmem:[#allocation5 + $0x38] sm:$0xff]
    %v64 = vld [vmem:[#allocation7] sm:$0x1]
    %v66 = vlaneseq
    %v67 = vshrl.u32 %v66, 7
    %v68 = vsub.s32 0, %v67
    %v69 = vrot.slane %v64, %v68
    %vm71 = vcmask 261120
    %v73 = vsel %vm71, %v54, 0
    %v76 = vsel %vm71, %v55, 0
    %v79 = vsel %vm71, %v56, 0
    %v82 = vsel %vm71, %v57, 0
    %v85 = vsel %vm71, %v58, 0
    %v88 = vsel %vm71, %v59, 0
    %v91 = vsel %vm71, %v60, 0
    %v94 = vsel %vm71, %v61, 0
    %v97 = vsel %vm71, %v62, 0
    %v100 = vsel %vm71, %v63, 0
    %102 = vmatprep.subr.mxu0 0.0
    %103 = vmatpush1.xpose.msra.mxu0 %v79
    %104 = vmatprep.subr.mxu0 0.0
    %105 = vmatpush1.xpose.msra.mxu0 %v82
    %106 = vmatprep.subr.mxu0 0.0
    %107 = vmatpush1.xpose.msra.mxu0 %v85
    %108 = vmatprep.subr.mxu0 0.0
    %109 = vmatpush1.xpose.msra.mxu0 %v88
    %110 = vmatprep.subr.mxu0 0.0
    %111 = vmatpush1.xpose.msra.mxu0 %v91
    %112 = vmatprep.subr.mxu0 0.0
    %113 = vmatpush1.xpose.msra.mxu0 %v94
    %114 = vmatprep.subr.mxu0 0.0
    %115 = vmatpush1.xpose.msra.mxu0 %v97
    %116 = vmatprep.subr.mxu0 0.0
    %117 = vmatpush1.xpose.msra.mxu0 %v100
    %118 = vmatprep.subr.mxu0 0.0
    %119 = vmatpush1.xpose.msra.mxu0 0.0
    %120 = vmatprep.subr.mxu0 0.0
    %121 = vmatpush1.xpose.msra.mxu0 0.0
    %122 = vmatprep.subr.mxu0 0.0
    %123 = vmatpush1.xpose.msra.mxu0 0.0
    %124 = vmatprep.subr.mxu0 0.0
    %125 = vmatpush1.xpose.msra.mxu0 0.0
    %126 = vmatprep.subr.mxu0 0.0
    %127 = vmatpush1.xpose.msra.mxu0 0.0
    %128 = vmatprep.subr.mxu0 0.0
    %129 = vmatpush1.xpose.msra.mxu0 0.0
    %130 = vmatprep.subr.mxu0 0.0
    %131 = vmatpush1.xpose.msra.mxu0 0.0
    %132 = vmatprep.subr.mxu0 0.0
    %133 = vmatpush1.xpose.msra.mxu0 0.0
    %134 = vmatprep.subr.mxu0 0.0
    %135 = vmatpush1.xpose.msra.mxu0 0.0
    %136 = vmatprep.subr.mxu0 0.0
    %137 = vmatpush1.xpose.msra.mxu0 0.0
    %138 = vmatprep.subr.mxu0 0.0
    %139 = vmatpush1.xpose.msra.mxu0 0.0
    %140 = vmatprep.subr.mxu0 0.0
    %141 = vmatpush1.xpose.msra.mxu0 0.0
    %142 = vmatprep.subr.mxu0 0.0
    %143 = vmatpush1.xpose.msra.mxu0 0.0
    %144 = vmatprep.subr.mxu0 0.0
    %145 = vmatpush1.xpose.msra.mxu0 0.0
    %146 = vmatprep.subr.mxu0 0.0
    %147 = vmatpush1.xpose.msra.mxu0 0.0
    %148 = vmatprep.subr.mxu0 0.0
    %149 = vmatpush1.xpose.msra.mxu0 0.0
    %150 = vmatprep.subr.mxu0 0.0
    %151 = vmatpush1.xpose.msra.mxu0 0.0
    %152 = vmatprep.subr.mxu0 0.0
    %153 = vmatpush1.xpose.msra.mxu0 0.0
    %154 = vmatprep.subr.mxu0 0.0
    %155 = vmatpush1.xpose.msra.mxu0 0.0
    %156 = vmatprep.subr.mxu0 0.0
    %157 = vmatpush1.xpose.msra.mxu0 0.0
    %158 = vmatprep.subr.mxu0 0.0
    %159 = vmatpush1.xpose.msra.mxu0 0.0
    %160 = vmatprep.subr.mxu0 0.0
    %161 = vmatpush1.xpose.msra.mxu0 0.0
    %162 = vmatprep.subr.mxu0 0.0
    %163 = vmatpush1.xpose.msra.mxu0 0.0
    %164 = vmatprep.subr.mxu0 0.0
    %165 = vmatpush1.xpose.msra.mxu0 0.0
    %166 = vmatprep.mubr.f32.mxu0 0.0
    %167 = vmatmul.mubr.f32.gmra.mrb[0].mxu0 %v73
    %v168 = vpop.f32.mrb[0].mxu0
    %v169 = vadd.f32 %v69, %v168
    %v170 = vpop.f32.mrb[0].mxu0
    %171 = vmatprep.mubr.f32.mxu0 0.0
    %172 = vmatmul.mubr.f32.gmra.mrb[0].mxu0 %v76
    %v173 = vpop.f32.mrb[0].mxu0
    %v174 = vadd.f32 %v69, %v173
    %v175 = vpop.f32.mrb[0].mxu0
    %176 = vdwg.mxu0
    %v177 = vmax.f32 %v169, 0.0
    %v178 = vmax.f32 %v174, 0.0
    %vm179 = vcmask 523264
    %180 = vst.msk [vmem:[#allocation8] sm:$0xff] %vm179, %v177
    %181 = vst.msk [vmem:[#allocation8 + $0x8] sm:$0xff] %vm179, %v178
    // Predicated region
    $region26: #{tpu_custom_call.1} parent=1 // pred_check
      _
    $region27: #{tpu_custom_call.1} parent=1 // pred_check_branch
      %183 = sbr.rel (0) target = $region29
    $region28: #{tpu_custom_call.1} parent=1 // pred_region
      %s185 = ssub.s32 256, 256
      %186 = vsyncadd [#allocation4], %s185
      %s187 = sshll.u32 [#allocation8], 4
      %s188 = int_to_ptr.vmem [resolvable:$true] %s187
      %193 = dma.vmem_to_hbm [thread:$0]  %s188, 256, %s3, [#allocation4], 128, 128, 8
    $region29: #{tpu_custom_call.1} parent=1 // pred_fallthru
      _
    // Predicated region
    $region30: #{tpu_custom_call.1} parent=1 // pred_check
      _
    $region31: #{tpu_custom_call.1} parent=1 // pred_check_branch
      %195 = sbr.rel (0) target = $region33
    $region32: #{tpu_custom_call.1} parent=1 // pred_region
      %196 = dma.done [#allocation4], 256
    $region33: #{tpu_custom_call.1} parent=1 // pred_fallthru
      _
    %197 = vsyncpa [#allocation3], 1
    %198 = vsyncpa [#allocation6], 1
    %199 = vsyncpa [#allocation4], 1

</llo_original>
